<compile_context>
chip_gen: v7x
topology: tpu7x:2x2x1
jax: 0.10.0
libtpu: 0.0.40
codegen_flags: <defaults>
</compile_context>

<pallas_src>
import jax
import jax.numpy as jnp
from jax.experimental import pallas as pl
from jax.experimental.pallas import tpu as pltpu


# Per-grid-step input-block target (pipelining sweet spot; 0.35 us/step
# overhead is negligible at >= 1 MiB blocks and HBM roofline saturates here).
_TARGET_BLOCK_BYTES = 3 << 20


def _vmem_capacity_bytes() -> int:
    """Physical VMEM of the current chip; conservative (v7x) if unknown."""
    try:
        return int(pltpu.get_tpu_info().vmem_capacity_bytes)
    except Exception:
        return 64 << 20  # v7x per-TC VMEM: the smallest current generation.


def _pick_tiles(b, h, n, logits_itemsize, mask_itemsize, vmem_budget):
    """Choose (TILE_B, TILE_R) targeting ~_TARGET_BLOCK_BYTES per input block."""

    def block_bytes(tb, tr):
        return tb * (h * tr * n * logits_itemsize + tr * n * mask_itemsize)

    # Respect native sublane packing of the narrowest input dtype.
    min_itemsize = min(logits_itemsize, mask_itemsize)
    if min_itemsize >= 4:
        min_tr = 8
    elif min_itemsize == 2:
        min_tr = 16
    else:
        min_tr = 32

    # Case 1: whole rows per batch already fit the small-block target; block
    # over batch (but keep >= 8 parallel-axis grid steps when B > 1 so v7x's
    # two TensorCores stay load-balanced).
    per_batch = block_bytes(1, n)
    if per_batch <= _TARGET_BLOCK_BYTES and 2 * per_batch <= vmem_budget:
        max_tb = max(1, _TARGET_BLOCK_BYTES // per_batch)
        if b > 1:
            max_tb = min(max_tb, max(1, b // 8))
        tile_b = 1
        for cand in range(min(max_tb, b), 0, -1):
            if b % cand == 0:
                tile_b = cand
                break
        return tile_b, n

    # Case 2: tile the channel-row axis (the math is row-separable; only the
    # final sqrt needs the full per-batch sum, done in the wrapper).  Prefer
    # the largest row tile that stays at or below the ~3 MiB target.
    smallest_fitting = None
    for tr in (2048, 1024, 512, 256, 128, 64, 32, 16, 8):
        if tr < min_tr or tr >= n or n % tr != 0:
            continue
        if 2 * block_bytes(1, tr) > vmem_budget:
            continue
        smallest_fitting = tr  # descending order -> ends at the smallest valid
        if block_bytes(1, tr) <= _TARGET_BLOCK_BYTES:
            return 1, tr
    if smallest_fitting is not None:
        return 1, smallest_fitting

    # Fallback: N has no suitable divisor or H is huge; use full rows (the
    # wrapper clamps vmem_limit_bytes to the physical budget).
    # TODO(synk): add a head-axis grid dimension / N padding for shape-general support.
    return 1, n


def _make_ccd_kernel(inv_temp, num_heads):
    inv_temp = float(inv_temp)
    scale = inv_temp / float(num_heads)   # fold 1/H and 1/temperature together

    def ccd_kernel(logits_ref, mask_ref, align_ref, sq_ref):
        r = pl.program_id(1)

        @pl.when(r == 0)
        def _init():
            align_ref[...] = jnp.zeros_like(align_ref)
            sq_ref[...] = jnp.zeros_like(sq_ref)

        # Head average as a running sum over per-head slices: per-head loads
        # interleave with the VALU adds; no full (TB,H,TR,N) f32 tile lives at
        # once.  H is a trace-time constant, so this unrolls statically.
        avg = logits_ref[:, 0, :, :].astype(jnp.float32)
        for hh in range(1, num_heads):
            avg = avg + logits_ref[:, hh, :, :].astype(jnp.float32)
        avg = avg * scale                      # (TB, TR, N), already /T /H

        mask = mask_ref[...].astype(jnp.float32)   # (TB, TR, N)

        # Row-wise log-softmax (temperature already folded into `avg`).
        row_max = jnp.max(avg, axis=-1, keepdims=True)
        shifted = avg - row_max
        lse = jnp.log(jnp.sum(jnp.exp(shifted), axis=-1, keepdims=True))
        log_probs = shifted - lse

        def _sum_all(x):
            # (TB, TR, N) -> (TB, 1, 1): reduce lanes, then sublanes.
            s = jnp.sum(x, axis=2, keepdims=True)
            return jnp.sum(s, axis=1, keepdims=True)

        # Broadcast (TB, 1, 1) partials into the lane-dense (TB, 8, 128)
        # resident accumulator blocks (unmasked stores).
        align_ref[...] += -_sum_all(mask * log_probs)
        sq_ref[...] += _sum_all(mask * mask)

    return ccd_kernel


def adaptive_ccd_loss(cfm_attention_logits,
                      soft_channel_mask,
                      alignment_temperature: float = 0.1,
                      regularization_lambda: float = 0.1,
                      alignment_lambda: float = 1.0):
    """Pallas implementation of AdaptiveCCDLoss.forward. Returns a scalar."""
    if cfm_attention_logits.ndim == 3:
        cfm_attention_logits = cfm_attention_logits[:, None, :, :]
    elif cfm_attention_logits.ndim != 4:
        raise ValueError(
            f"Unsupported cfm_attention_logits shape: {cfm_attention_logits.shape}")

    b, h, n_l, _ = cfm_attention_logits.shape
    b_m, n, _ = soft_channel_mask.shape
    assert b == b_m and n_l == n

    logits_isz = cfm_attention_logits.dtype.itemsize
    mask_isz = soft_channel_mask.dtype.itemsize

    vmem_cap = _vmem_capacity_bytes()
    vmem_budget = (3 * vmem_cap) // 4      # headroom for outputs / scratch

    tile_b, tile_r = _pick_tiles(b, h, n, logits_isz, mask_isz, vmem_budget)
    assert b % tile_b == 0 and n % tile_r == 0
    grid = (b // tile_b, n // tile_r)

    block_bytes = tile_b * (h * tile_r * n * logits_isz + tile_r * n * mask_isz)
    vmem_limit = int(min(vmem_budget,
                         max(16 << 20, 2 * block_bytes + (4 << 20))))

    kernel = _make_ccd_kernel(1.0 / alignment_temperature, h)

    partial_shape = jax.ShapeDtypeStruct((b, 8, 128), jnp.float32)
    partial_spec = pl.BlockSpec((tile_b, 8, 128), lambda bi, ri: (bi, 0, 0))

    # Advisory cost: this call is large and HBM-bandwidth bound.
    bytes_accessed = int(b * n * n * (h * logits_isz + mask_isz)
                         + 2 * b * 8 * 128 * 4)
    cost = pl.CostEstimate(flops=int(b * n * n * (h + 8)),
                           transcendentals=int(b * n * (n + 1)),
                           bytes_accessed=bytes_accessed)

    align_sums, sq_sums = pl.pallas_call(
        kernel,
        out_shape=(partial_shape, partial_shape),
        grid_spec=pltpu.PrefetchScalarGridSpec(
            num_scalar_prefetch=0,
            grid=grid,
            in_specs=[
                pl.BlockSpec((tile_b, h, tile_r, n),
                             lambda bi, ri: (bi, 0, ri, 0)),
                pl.BlockSpec((tile_b, tile_r, n),
                             lambda bi, ri: (bi, ri, 0)),
            ],
            out_specs=(partial_spec, partial_spec),
        ),
        compiler_params=pltpu.CompilerParams(
            dimension_semantics=("parallel", "arbitrary"),
            vmem_limit_bytes=vmem_limit),
        cost_estimate=cost,
    )(cfm_attention_logits, soft_channel_mask)

    align_b = align_sums[:, 0, 0]   # (B,) sum over (N, N) of -(mask * log_probs)
    sq_b = sq_sums[:, 0, 0]         # (B,) sum(M^2)

    # trace(M) is computed outside the hot loop (reads only B*N elements).
    diag_b = jnp.trace(soft_channel_mask.astype(jnp.float32),
                       axis1=-2, axis2=-1)

    nf = jnp.float32(n)
    alignment_loss = jnp.mean(align_b) / nf
    # ||I - M||_F^2 = sum(M^2) - 2*trace(M) + N
    fro = jnp.sqrt(jnp.maximum(sq_b - 2.0 * diag_b + nf, 0.0))
    mask_regularization_loss = jnp.mean(fro / nf)
    return (alignment_lambda * alignment_loss +
            regularization_lambda * mask_regularization_loss)


def _reference(cfm_attention_logits, soft_channel_mask,
               alignment_temperature=0.1, regularization_lambda=0.1,
               alignment_lambda=1.0):
    """Pure-JAX reference mirroring the PyTorch forward."""
    if cfm_attention_logits.ndim == 4:
        avg = jnp.mean(cfm_attention_logits, axis=1)
    else:
        avg = cfm_attention_logits
    log_probs = jax.nn.log_softmax(avg / alignment_temperature, axis=-1)
    alignment_loss = jnp.mean(-(soft_channel_mask * log_probs).sum(axis=-1))
    n = soft_channel_mask.shape[-1]
    ident = jnp.eye(n, dtype=soft_channel_mask.dtype)[None]
    diff = ident - soft_channel_mask
    fro = jnp.sqrt(jnp.sum(diff * diff, axis=(-2, -1)))
    mask_reg = jnp.mean(fro / n)
    return alignment_lambda * alignment_loss + regularization_lambda * mask_reg


if __name__ == "__main__":
    key = jax.random.PRNGKey(0)
    k1, k2, k3 = jax.random.split(key, 3)

    B, H, N = 2, 4, 8  # batch, cfm heads, channels
    cfm_attention_logits = jax.random.normal(k1, (B, H, N, N), dtype=jnp.float32)
    # Soft channel mask: each row ~ a probability distribution.
    soft_channel_mask = jax.nn.softmax(
        jax.random.normal(k2, (B, N, N), dtype=jnp.float32), axis=-1)

    loss = adaptive_ccd_loss(cfm_attention_logits, soft_channel_mask)
    loss = jax.block_until_ready(loss)
    ref = _reference(cfm_attention_logits, soft_channel_mask)
    assert jnp.allclose(loss, ref, rtol=1e-5, atol=1e-5), (loss, ref)

    # Also exercise the pre-averaged (3-D logits) path.
    logits_3d = jax.random.normal(k3, (B, N, N), dtype=jnp.float32)
    loss3 = jax.block_until_ready(adaptive_ccd_loss(logits_3d, soft_channel_mask))
    ref3 = _reference(logits_3d, soft_channel_mask)
    assert jnp.allclose(loss3, ref3, rtol=1e-5, atol=1e-5), (loss3, ref3)

    print("KERNEL_OK")
</pallas_src>

<mosaic_0001>
module attributes {stable_mosaic.version = 11 : i64} {
  func.func @ccd_kernel(%arg0: i32, %arg1: i32, %arg2: memref<1x4x8x8xf32, #tpu.memory_space<vmem>>, %arg3: memref<1x8x8xf32, #tpu.memory_space<vmem>>, %arg4: memref<1x8x128xf32, #tpu.memory_space<vmem>>, %arg5: memref<1x8x128xf32, #tpu.memory_space<vmem>>) attributes {dimension_semantics = [#tpu.dimension_semantics<parallel>, #tpu.dimension_semantics<arbitrary>], iteration_bounds = array<i64: 2, 1>, scalar_prefetch = 0 : i64, scratch_operands = 0 : i64, tpu.core_type = #tpu.core_type<tc>, window_params = [{transform_indices = @transform_0, window_bounds = array<i64: 1, 4, 8, 8>}, {transform_indices = @transform_1, window_bounds = array<i64: 1, 8, 8>}, {transform_indices = @transform_2, window_bounds = array<i64: 1, 8, 128>}, {transform_indices = @transform_3, window_bounds = array<i64: 1, 8, 128>}]} {
    %c0_i32 = arith.constant 0 : i32
    %0 = arith.cmpi eq, %arg1, %c0_i32 : i32
    %1 = arith.extui %0 : i1 to i32
    %c0_i32_0 = arith.constant 0 : i32
    %2 = arith.cmpi ne, %1, %c0_i32_0 : i32
    scf.if %2 {
      %cst_35 = arith.constant 0.000000e+00 : f32
      %47 = vector.broadcast %cst_35 : f32 to vector<1x8x128xf32>
      %c0_36 = arith.constant 0 : index
      %c0_37 = arith.constant 0 : index
      %c0_38 = arith.constant 0 : index
      %48 = vector.load %arg4[%c0_36, %c0_37, %c0_38] : memref<1x8x128xf32, #tpu.memory_space<vmem>>, vector<1x8x128xf32>
      tpu.vector_store %arg4[%c0_36, %c0_37, %c0_38], %47 {strides = array<i32>} : memref<1x8x128xf32, #tpu.memory_space<vmem>>, vector<1x8x128xf32>,
      %cst_39 = arith.constant 0.000000e+00 : f32
      %49 = vector.broadcast %cst_39 : f32 to vector<1x8x128xf32>
      %c0_40 = arith.constant 0 : index
      %c0_41 = arith.constant 0 : index
      %c0_42 = arith.constant 0 : index
      %50 = vector.load %arg5[%c0_40, %c0_41, %c0_42] : memref<1x8x128xf32, #tpu.memory_space<vmem>>, vector<1x8x128xf32>
      tpu.vector_store %arg5[%c0_40, %c0_41, %c0_42], %49 {strides = array<i32>} : memref<1x8x128xf32, #tpu.memory_space<vmem>>, vector<1x8x128xf32>,
    } else {
    }
    %c0 = arith.constant 0 : index
    %c0_1 = arith.constant 0 : index
    %c0_2 = arith.constant 0 : index
    %c0_3 = arith.constant 0 : index
    %3 = vector.load %arg2[%c0, %c0_1, %c0_2, %c0_3] : memref<1x4x8x8xf32, #tpu.memory_space<vmem>>, vector<1x1x8x8xf32>
    %4 = vector.shape_cast %3 : vector<1x1x8x8xf32> to vector<1x8x8xf32>
    %c0_4 = arith.constant 0 : index
    %c1 = arith.constant 1 : index
    %c0_5 = arith.constant 0 : index
    %c0_6 = arith.constant 0 : index
    %5 = vector.load %arg2[%c0_4, %c1, %c0_5, %c0_6] : memref<1x4x8x8xf32, #tpu.memory_space<vmem>>, vector<1x1x8x8xf32>
    %6 = vector.shape_cast %5 : vector<1x1x8x8xf32> to vector<1x8x8xf32>
    %7 = arith.addf %4, %6 : vector<1x8x8xf32>
    %c0_7 = arith.constant 0 : index
    %c2 = arith.constant 2 : index
    %c0_8 = arith.constant 0 : index
    %c0_9 = arith.constant 0 : index
    %8 = vector.load %arg2[%c0_7, %c2, %c0_8, %c0_9] : memref<1x4x8x8xf32, #tpu.memory_space<vmem>>, vector<1x1x8x8xf32>
    %9 = vector.shape_cast %8 : vector<1x1x8x8xf32> to vector<1x8x8xf32>
    %10 = arith.addf %7, %9 : vector<1x8x8xf32>
    %c0_10 = arith.constant 0 : index
    %c3 = arith.constant 3 : index
    %c0_11 = arith.constant 0 : index
    %c0_12 = arith.constant 0 : index
    %11 = vector.load %arg2[%c0_10, %c3, %c0_11, %c0_12] : memref<1x4x8x8xf32, #tpu.memory_space<vmem>>, vector<1x1x8x8xf32>
    %12 = vector.shape_cast %11 : vector<1x1x8x8xf32> to vector<1x8x8xf32>
    %13 = arith.addf %10, %12 : vector<1x8x8xf32>
    %cst = arith.constant 2.500000e+00 : f32
    %14 = vector.broadcast %cst : f32 to vector<1x8x8xf32>
    %15 = arith.mulf %13, %14 : vector<1x8x8xf32>
    %c0_13 = arith.constant 0 : index
    %c0_14 = arith.constant 0 : index
    %c0_15 = arith.constant 0 : index
    %16 = vector.load %arg3[%c0_13, %c0_14, %c0_15] : memref<1x8x8xf32, #tpu.memory_space<vmem>>, vector<1x8x8xf32>
    %cst_16 = arith.constant dense<0xFF800000> : vector<1x8xf32>
    %17 = vector.multi_reduction <maximumf>, %15, %cst_16 [2] : vector<1x8x8xf32> to vector<1x8xf32>
    %18 = vector.shape_cast %17 : vector<1x8xf32> to vector<1x8x1xf32>
    %19 = vector.broadcast %18 : vector<1x8x1xf32> to vector<1x8x8xf32>
    %20 = arith.subf %15, %19 : vector<1x8x8xf32>
    %21 = math.exp %20 : vector<1x8x8xf32>
    %cst_17 = arith.constant dense<0.000000e+00> : vector<1x8xf32>
    %22 = vector.multi_reduction <add>, %21, %cst_17 [2] : vector<1x8x8xf32> to vector<1x8xf32>
    %23 = vector.shape_cast %22 : vector<1x8xf32> to vector<1x8x1xf32>
    %24 = math.log %23 : vector<1x8x1xf32>
    %25 = vector.broadcast %24 : vector<1x8x1xf32> to vector<1x8x8xf32>
    %26 = arith.subf %20, %25 : vector<1x8x8xf32>
    %c0_18 = arith.constant 0 : index
    %c0_19 = arith.constant 0 : index
    %c0_20 = arith.constant 0 : index
    %27 = vector.load %arg4[%c0_18, %c0_19, %c0_20] : memref<1x8x128xf32, #tpu.memory_space<vmem>>, vector<1x8x128xf32>
    %28 = arith.mulf %16, %26 : vector<1x8x8xf32>
    %cst_21 = arith.constant dense<0.000000e+00> : vector<1x8xf32>
    %29 = vector.multi_reduction <add>, %28, %cst_21 [2] : vector<1x8x8xf32> to vector<1x8xf32>
    %30 = vector.shape_cast %29 : vector<1x8xf32> to vector<1x8x1xf32>
    %cst_22 = arith.constant dense<0.000000e+00> : vector<1x1xf32>
    %31 = vector.multi_reduction <add>, %30, %cst_22 [1] : vector<1x8x1xf32> to vector<1x1xf32>
    %32 = vector.shape_cast %31 : vector<1x1xf32> to vector<1x1x1xf32>
    %cst_23 = arith.constant 0.000000e+00 : f32
    %33 = vector.broadcast %cst_23 : f32 to vector<1x1x1xf32>
    %34 = arith.subf %33, %32 : vector<1x1x1xf32>
    %35 = vector.broadcast %34 : vector<1x1x1xf32> to vector<1x8x128xf32>
    %36 = arith.addf %27, %35 : vector<1x8x128xf32>
    %c0_24 = arith.constant 0 : index
    %c0_25 = arith.constant 0 : index
    %c0_26 = arith.constant 0 : index
    %37 = vector.load %arg4[%c0_24, %c0_25, %c0_26] : memref<1x8x128xf32, #tpu.memory_space<vmem>>, vector<1x8x128xf32>
    tpu.vector_store %arg4[%c0_24, %c0_25, %c0_26], %36 {strides = array<i32>} : memref<1x8x128xf32, #tpu.memory_space<vmem>>, vector<1x8x128xf32>,
    %c0_27 = arith.constant 0 : index
    %c0_28 = arith.constant 0 : index
    %c0_29 = arith.constant 0 : index
    %38 = vector.load %arg5[%c0_27, %c0_28, %c0_29] : memref<1x8x128xf32, #tpu.memory_space<vmem>>, vector<1x8x128xf32>
    %39 = arith.mulf %16, %16 : vector<1x8x8xf32>
    %cst_30 = arith.constant dense<0.000000e+00> : vector<1x8xf32>
    %40 = vector.multi_reduction <add>, %39, %cst_30 [2] : vector<1x8x8xf32> to vector<1x8xf32>
    %41 = vector.shape_cast %40 : vector<1x8xf32> to vector<1x8x1xf32>
    %cst_31 = arith.constant dense<0.000000e+00> : vector<1x1xf32>
    %42 = vector.multi_reduction <add>, %41, %cst_31 [1] : vector<1x8x1xf32> to vector<1x1xf32>
    %43 = vector.shape_cast %42 : vector<1x1xf32> to vector<1x1x1xf32>
    %44 = vector.broadcast %43 : vector<1x1x1xf32> to vector<1x8x128xf32>
    %45 = arith.addf %38, %44 : vector<1x8x128xf32>
    %c0_32 = arith.constant 0 : index
    %c0_33 = arith.constant 0 : index
    %c0_34 = arith.constant 0 : index
    %46 = vector.load %arg5[%c0_32, %c0_33, %c0_34] : memref<1x8x128xf32, #tpu.memory_space<vmem>>, vector<1x8x128xf32>
    tpu.vector_store %arg5[%c0_32, %c0_33, %c0_34], %45 {strides = array<i32>} : memref<1x8x128xf32, #tpu.memory_space<vmem>>, vector<1x8x128xf32>,
    return
  }
  func.func @transform_0(%arg0: i32, %arg1: i32) -> (i32, i32, i32, i32) {
    %c0_i32 = arith.constant 0 : i32
    %c0_i32_0 = arith.constant 0 : i32
    %c0_i32_1 = arith.constant 0 : i32
    return %arg0, %c0_i32, %arg1, %c0_i32_0 : i32, i32, i32, i32
  }
  func.func @transform_1(%arg0: i32, %arg1: i32) -> (i32, i32, i32) {
    %c0_i32 = arith.constant 0 : i32
    %c0_i32_0 = arith.constant 0 : i32
    return %arg0, %arg1, %c0_i32 : i32, i32, i32
  }
  func.func @transform_2(%arg0: i32, %arg1: i32) -> (i32, i32, i32) {
    %c0_i32 = arith.constant 0 : i32
    %c0_i32_0 = arith.constant 0 : i32
    %c0_i32_1 = arith.constant 0 : i32
    return %arg0, %c0_i32, %c0_i32_0 : i32, i32, i32
  }
  func.func @transform_3(%arg0: i32, %arg1: i32) -> (i32, i32, i32) {
    %c0_i32 = arith.constant 0 : i32
    %c0_i32_0 = arith.constant 0 : i32
    %c0_i32_1 = arith.constant 0 : i32
    return %arg0, %c0_i32, %c0_i32_0 : i32, i32, i32
  }
}

</mosaic_0001>

<llo_original>
// kernel: tpu_custom_call.1
$region0: #{tpu_custom_call.1}
  #allocation0 [shape = 'u32[]', space=smem, size = 0x4, offset = 0x4, fixed_abs, tag = 'smem constant byte address 0x4 - core index']
  #allocation1 [shape = 'u32[144,128]{1,0:T(1,128)}', space=vmem, size = 0x12000, scoped, tag = 'internal scratch']
  %s0 = inlined_call_operand.hbm [shape: f32[2,4,8,8], index: 0, kind: input, shape index: {}]
  %s1 = inlined_call_operand.hbm [shape: f32[2,8,8], index: 1, kind: input, shape index: {}]
  %s2 = inlined_call_operand.hbm [shape: f32[2,8,128], index: 2, kind: output, shape index: {0}]
  %s3 = inlined_call_operand.hbm [shape: f32[2,8,128], index: 3, kind: output, shape index: {1}]
  %4 = xla_tuple %s2, %s3
  %s5 = sld [smem:[#allocation0]]
  $region61: #{tpu_custom_call.1} parent=0
    _
  %s7 = ssub.s32 1, %s5
  %s8 = scalar_select 0, %s7, %s5
  $region1: #{tpu_custom_call.1} parent=0
    #allocation2 [shape = 'u8[32768]{0}', space=vmem, size = 0x8000, scoped, tag = 'input window, operand 0']
    #allocation3 [shape = 's32[2]{0}', space=sflag, size = 0x8, scoped, tag = 'scoped memory for tpu_custom_call.1']
    #allocation4 [shape = 's32[2]{0}', space=sflag, size = 0x8, scoped, tag = 'scoped memory for tpu_custom_call.1']
    #allocation5 [shape = 'u8[8192]{0}', space=vmem, size = 0x2000, scoped, tag = 'input window, operand 1']
    #allocation6 [shape = 's32[2]{0}', space=sflag, size = 0x8, scoped, tag = 'scoped memory for tpu_custom_call.1']
    #allocation7 [shape = 'u8[8192]{0}', space=vmem, size = 0x2000, scoped, tag = 'output window, operand 0']
    #allocation8 [shape = 'u8[8192]{0}', space=vmem, size = 0x2000, scoped, tag = 'output window, operand 1']
    #allocation9 [shape = 's32[2]{0}', space=sflag, size = 0x8, scoped, tag = 'scoped memory for tpu_custom_call.1']
    %9 = vsyncpa [#allocation3], 0
    %s10 = scalar_lea.sflag [#allocation3], 1
    %11 = vsyncpa %s10, 0
    %12 = vsyncpa [#allocation6], 0
    %s13 = scalar_lea.sflag [#allocation6], 1
    %14 = vsyncpa %s13, 0
    %15 = vsyncpa [#allocation4], 0
    %s16 = scalar_lea.sflag [#allocation4], 1
    %17 = vsyncpa %s16, 0
    %18 = vsyncpa [#allocation9], 0
    %s19 = scalar_lea.sflag [#allocation9], 1
    %20 = vsyncpa %s19, 0
    loop: start=0, step=1, limit=4
    $region2: #{tpu_custom_call.1} parent=1 // loop_pre_header
      _
    $region3: #{tpu_custom_call.1} parent=1 // loop_header
      %s22 = sphi 0, %s26
      %p23 = scmp.ge.s32.totalorder %s22, 4
      %s29 = sphi 0, %s41
      %s30 = sphi 0, %s37
      %s31 = sphi 0, %s29
      %s32 = sphi 0, %s30
      %s33 = sphi 0, %s31
      %s34 = sphi 0, %s32
      %s46 = sphi 0, %s48
      %s49 = sphi 0, %s46
      %s50 = sphi 0, %s49
      %s66 = sphi 0, %s50
      %s74 = sphi 0, %s76
      %s77 = sphi 0, %s74
      %s78 = sphi 0, %s77
      %s94 = sphi 0, %s78
      %s100 = sphi 0, %s102
      %s103 = sphi 0, %s100
      %s104 = sphi 0, %s103
      %s120 = sphi 0, %s104
      %s126 = sphi 0, %s128
      %s129 = sphi 0, %s126
      %s130 = sphi 0, %s129
      %s146 = sphi 0, %s130
    $region4: #{tpu_custom_call.1} parent=1 // loop_header_branch
      %25 = sbr.rel (%p23) target = $region8
    $region5: #{tpu_custom_call.1} parent=1 // loop_body
      %s27 = ssub.s32 %s22, 1
      %s28 = ssub.s32 %s22, 2
      %s35 = sadd.s32 1, %s30
      %p36 = scmp.ge.s32.totalorder %s35, 1
      %s37 = scalar_select %p36, 0, %s35
      %s38 = sadd.s32 1, %s29
      %s39 = scalar_select %p36, %s38, %s29
      %p40 = scmp.ge.s32.totalorder %s39, 2
      %s41 = scalar_select %p40, 0, %s39
      %s42 = ssub.s32 %s29, %s41
      %s43 = ssub.s32 %s30, %s37
      %s44 = sor.u32 %s42, %s43
      %p45 = scmp.eq.s32.totalorder %s44, 0
      %s47 = sadd.s32 %s46, 1
      %s48 = scalar_select %p45, %s46, %s47
      %p51 = pneg %p45
      %p52 = scmp.eq.s32.totalorder %s22, 1
      %p53 = por %p51, %p52
      %p54 = scmp.ne.s32.totalorder %s46, %s49
      %p55 = scmp.eq.s32.totalorder %s22, 0
      %p56 = por %p54, %p55
      %p57 = scmp.ne.s32.totalorder %s46, %s49
      %p58 = scmp.eq.s32.totalorder %s27, 1
      %p59 = por %p57, %p58
      %p60 = scmp.ne.s32.totalorder %s49, %s50
      %p61 = scmp.eq.s32.totalorder %s27, 0
      %p62 = por %p60, %p61
      %p63 = scmp.ne.s32.totalorder %s49, %s50
      %p64 = scmp.eq.s32.totalorder %s28, 1
      %p65 = por %p63, %p64
      %p67 = scmp.ne.s32.totalorder %s50, %s66
      %p68 = scmp.eq.s32.totalorder %s28, 0
      %p69 = por %p67, %p68
      %s70 = ssub.s32 %s29, %s41
      %s71 = ssub.s32 %s30, %s37
      %s72 = sor.u32 %s70, %s71
      %p73 = scmp.eq.s32.totalorder %s72, 0
      %s75 = sadd.s32 %s74, 1
      %s76 = scalar_select %p73, %s74, %s75
      %p79 = pneg %p73
      %p80 = scmp.eq.s32.totalorder %s22, 1
      %p81 = por %p79, %p80
      %p82 = scmp.ne.s32.totalorder %s74, %s77
      %p83 = scmp.eq.s32.totalorder %s22, 0
      %p84 = por %p82, %p83
      %p85 = scmp.ne.s32.totalorder %s74, %s77
      %p86 = scmp.eq.s32.totalorder %s27, 1
      %p87 = por %p85, %p86
      %p88 = scmp.ne.s32.totalorder %s77, %s78
      %p89 = scmp.eq.s32.totalorder %s27, 0
      %p90 = por %p88, %p89
      %p91 = scmp.ne.s32.totalorder %s77, %s78
      %p92 = scmp.eq.s32.totalorder %s28, 1
      %p93 = por %p91, %p92
      %p95 = scmp.ne.s32.totalorder %s78, %s94
      %p96 = scmp.eq.s32.totalorder %s28, 0
      %p97 = por %p95, %p96
      %s98 = ssub.s32 %s29, %s41
      %p99 = scmp.eq.s32.totalorder %s98, 0
      %s101 = sadd.s32 %s100, 1
      %s102 = scalar_select %p99, %s100, %s101
      %p105 = pneg %p99
      %p106 = scmp.eq.s32.totalorder %s22, 1
      %p107 = por %p105, %p106
      %p108 = scmp.ne.s32.totalorder %s100, %s103
      %p109 = scmp.eq.s32.totalorder %s22, 0
      %p110 = por %p108, %p109
      %p111 = scmp.ne.s32.totalorder %s100, %s103
      %p112 = scmp.eq.s32.totalorder %s27, 1
      %p113 = por %p111, %p112
      %p114 = scmp.ne.s32.totalorder %s103, %s104
      %p115 = scmp.eq.s32.totalorder %s27, 0
      %p116 = por %p114, %p115
      %p117 = scmp.ne.s32.totalorder %s103, %s104
      %p118 = scmp.eq.s32.totalorder %s28, 1
      %p119 = por %p117, %p118
      %p121 = scmp.ne.s32.totalorder %s104, %s120
      %p122 = scmp.eq.s32.totalorder %s28, 0
      %p123 = por %p121, %p122
      %s124 = ssub.s32 %s29, %s41
      %p125 = scmp.eq.s32.totalorder %s124, 0
      %s127 = sadd.s32 %s126, 1
      %s128 = scalar_select %p125, %s126, %s127
      %p131 = pneg %p125
      %p132 = scmp.eq.s32.totalorder %s22, 1
      %p133 = por %p131, %p132
      %p134 = scmp.ne.s32.totalorder %s126, %s129
      %p135 = scmp.eq.s32.totalorder %s22, 0
      %p136 = por %p134, %p135
      %p137 = scmp.ne.s32.totalorder %s126, %s129
      %p138 = scmp.eq.s32.totalorder %s27, 1
      %p139 = por %p137, %p138
      %p140 = scmp.ne.s32.totalorder %s129, %s130
      %p141 = scmp.eq.s32.totalorder %s27, 0
      %p142 = por %p140, %p141
      %p143 = scmp.ne.s32.totalorder %s129, %s130
      %p144 = scmp.eq.s32.totalorder %s28, 1
      %p145 = por %p143, %p144
      %p147 = scmp.ne.s32.totalorder %s130, %s146
      %p148 = scmp.eq.s32.totalorder %s28, 0
      %p149 = por %p147, %p148
      %p150 = scmp.le.s32.totalorder 1, %s22
      %p151 = scmp.lt.s32.totalorder %s22, 3
      %p152 = pnand %p150, %p151
      %p153 = pneg %p152
      // Predicated region
      $region9: #{tpu_custom_call.1} parent=5 // pred_check
        _
      $region10: #{tpu_custom_call.1} parent=5 // pred_check_branch
        %155 = sbr.rel (%p152) target = $region12
      $region11: #{tpu_custom_call.1} parent=5 // pred_region
        %s156 = ssub.s32 %s22, 1
      $region12: #{tpu_custom_call.1} parent=5 // pred_fallthru
        _
      %p157 = scmp.lt.s32.totalorder %s22, 2
      // Predicated region
      $region13: #{tpu_custom_call.1} parent=5 // pred_check
        %p158 = pneg %p157
      $region14: #{tpu_custom_call.1} parent=5 // pred_check_branch
        %160 = sbr.rel (%p158) target = $region16
      $region15: #{tpu_custom_call.1} parent=5 // pred_region
        // Predicated region
        $region17: #{tpu_custom_call.1} parent=15 // pred_check
          %p161 = pneg %p56
        $region18: #{tpu_custom_call.1} parent=15 // pred_check_branch
          %163 = sbr.rel (%p161) target = $region20
        $region19: #{tpu_custom_call.1} parent=15 // pred_region
          %s164 = sand.u32 %s46, 1
          %s165 = scalar_lea.sflag [#allocation3], %s164
          %s166 = sand.u32 %s46, 1
          %s167 = smul.addr %s166, 32
          %s168 = scalar_lea.vmem [#allocation2], %s167
          %s170 = ssub.s32 512, 512
          %171 = vsyncadd %s165, %s170
          %s172 = smul.addr %s29, 4
          %s173 = sadd.s32 %s30, %s172
          %s174 = smul.addr %s173, 128
          %s175 = scalar_lea.hbm %s0, %s174
          %s176 = sshll.u32 %s168, 4
          %s177 = int_to_ptr.vmem [resolvable:$true] %s176
          %182 = dma.hbm_to_vmem [thread:$0]  %s175, 512, %s177, %s165, 128, 128, 8
        $region20: #{tpu_custom_call.1} parent=15 // pred_fallthru
          _
        // Predicated region
        $region21: #{tpu_custom_call.1} parent=15 // pred_check
          %p183 = pneg %p84
        $region22: #{tpu_custom_call.1} parent=15 // pred_check_branch
          %185 = sbr.rel (%p183) target = $region24
        $region23: #{tpu_custom_call.1} parent=15 // pred_region
          %s186 = sand.u32 %s74, 1
          %s187 = scalar_lea.sflag [#allocation6], %s186
          %s188 = sand.u32 %s74, 1
          %s189 = smul.addr %s188, 8
          %s190 = scalar_lea.vmem [#allocation5], %s189
          %s192 = ssub.s32 128, 128
          %193 = vsyncadd %s187, %s192
          %s194 = sadd.s32 %s30, %s29
          %s195 = smul.addr %s194, 128
          %s196 = scalar_lea.hbm %s1, %s195
          %s198 = sshll.u32 %s190, 4
          %s199 = int_to_ptr.vmem [resolvable:$true] %s198
          %201 = dma.hbm_to_vmem [thread:$0]  %s196, 128, %s199, %s187
        $region24: #{tpu_custom_call.1} parent=15 // pred_fallthru
          _
      $region16: #{tpu_custom_call.1} parent=5 // pred_fallthru
        _
      %p202 = scmp.le.s32.totalorder 1, %s22
      %p203 = scmp.lt.s32.totalorder %s22, 3
      %p204 = pnand %p202, %p203
      %p205 = pneg %p204
      // Predicated region
      $region25: #{tpu_custom_call.1} parent=5 // pred_check
        _
      $region26: #{tpu_custom_call.1} parent=5 // pred_check_branch
        %207 = sbr.rel (%p204) target = $region28
      $region27: #{tpu_custom_call.1} parent=5 // pred_region
        %s208 = ssub.s32 %s22, 1
        %s209 = sand.u32 %s49, 1
        %s210 = scalar_lea.sflag [#allocation3], %s209
        %s211 = sand.u32 %s49, 1
        %s212 = smul.addr %s211, 32
        %s213 = scalar_lea.vmem [#allocation2], %s212
        // Predicated region
        $region29: #{tpu_custom_call.1} parent=27 // pred_check
          %p214 = pneg %p62
        $region30: #{tpu_custom_call.1} parent=27 // pred_check_branch
          %216 = sbr.rel (%p214) target = $region32
        $region31: #{tpu_custom_call.1} parent=27 // pred_region
          %217 = dma.done %s210, 512
        $region32: #{tpu_custom_call.1} parent=27 // pred_fallthru
          _
        %s218 = sand.u32 %s77, 1
        %s219 = scalar_lea.sflag [#allocation6], %s218
        %s220 = sand.u32 %s77, 1
        %s221 = smul.addr %s220, 8
        %s222 = scalar_lea.vmem [#allocation5], %s221
        // Predicated region
        $region33: #{tpu_custom_call.1} parent=27 // pred_check
          %p223 = pneg %p90
        $region34: #{tpu_custom_call.1} parent=27 // pred_check_branch
          %225 = sbr.rel (%p223) target = $region36
        $region35: #{tpu_custom_call.1} parent=27 // pred_region
          %226 = dma.done %s219, 128
        $region36: #{tpu_custom_call.1} parent=27 // pred_fallthru
          _
        %s227 = sand.u32 %s49, 1
        %s228 = scalar_lea.sflag [#allocation3], %s227
        %s229 = sand.u32 %s49, 1
        %s230 = smul.addr %s229, 32
        %s231 = scalar_lea.vmem [#allocation2], %s230
        %p232 = pneg %p62
        %p233 = pneg %p59
        %s234 = sand.u32 %s77, 1
        %s235 = scalar_lea.sflag [#allocation6], %s234
        %s236 = sand.u32 %s77, 1
        %s237 = smul.addr %s236, 8
        %s238 = scalar_lea.vmem [#allocation5], %s237
        %p239 = pneg %p90
        %p240 = pneg %p87
        %p241 = pneg %p116
        %p242 = pneg %p113
        %s243 = sand.u32 %s103, 1
        %s244 = scalar_lea.sflag [#allocation4], %s243
        %s245 = sand.u32 %s103, 1
        %s246 = smul.addr %s245, 8
        %s247 = scalar_lea.vmem [#allocation7], %s246
        %p248 = pneg %p142
        %p249 = pneg %p139
        %s250 = sand.u32 %s129, 1
        %s251 = scalar_lea.sflag [#allocation9], %s250
        %s252 = sand.u32 %s129, 1
        %s253 = smul.addr %s252, 8
        %s254 = scalar_lea.vmem [#allocation8], %s253
        %p255 = scmp.eq.s32.totalorder %s32, 0
        // Predicated region
        $region37: #{tpu_custom_call.1} parent=27 // pred_check
          %p256 = pneg %p255
        $region38: #{tpu_custom_call.1} parent=27 // pred_check_branch
          %258 = sbr.rel (%p256) target = $region40
        $region39: #{tpu_custom_call.1} parent=27 // pred_region
          %259 = vst [vmem:[%s247] sm:$0xff] 0.0
          %260 = vst [vmem:[%s254] sm:$0xff] 0.0
        $region40: #{tpu_custom_call.1} parent=27 // pred_fallthru
          _
        %v261 = vld [vmem:[%s213] sm:$0xff]
        %s262 = scalar_lea.vmem %s213, 8 [#allocation2]
        %v263 = vld [vmem:[%s262] sm:$0xff]
        %v264 = vadd.f32 %v261, %v263
        %s265 = scalar_lea.vmem %s213, 16 [#allocation2]
        %v266 = vld [vmem:[%s265] sm:$0xff]
        %v267 = vadd.f32 %v264, %v266
        %s268 = scalar_lea.vmem %s213, 24 [#allocation2]
        %v269 = vld [vmem:[%s268] sm:$0xff]
        %v270 = vadd.f32 %v267, %v269
        %v271 = vmul.f32 %v270, 2.5
        %v272 = vld [vmem:[%s222] sm:$0xff]
        %vm273 = vcmask 64512
        %v274 = vsel %vm273, %v271, -inf
        %275 = vmax.xlane.f32.xlu0 %v274
        %v276 = vpop.xlane.xlu0 %275
        %v277 = vsub.f32 %v271, %v276
        %v278 = vmul.f32 %v277, 1.442695
        %v279 = vpow.pop %v278
        %v280 = vsel %vm273, %v279, 0.0
        %281 = vadd.xlane.f32.xlu0 %v280
        %v282 = vpop.xlane.xlu0 %281
        %v283 = vlog2.pop %v282
        %v284 = vmul.f32 %v283, 0.6931472
        %v285 = vsub.f32 %v277, %v284
        %v286 = vld [vmem:[%s247] sm:$0xff]
        %v287 = vmul.f32 %v272, %v285
        %v288 = vsel %vm273, %v287, 0.0
        %289 = vadd.xlane.f32.xlu0 %v288
        %v290 = vpop.xlane.xlu0 %289
        %v291 = vrot.slane %v290, 4
        %v292 = vadd.f32 %v290, %v291
        %v293 = vrot.slane %v292, 2
        %v294 = vadd.f32 %v292, %v293
        %v295 = vrot.slane %v294, 1
        %v296 = vadd.f32 %v294, %v295
        %v297 = vsub.f32 0.0, %v296
        %v298 = vadd.f32 %v286, %v297
        %299 = vst [vmem:[%s247] sm:$0xff] %v298
        %v300 = vld [vmem:[%s254] sm:$0xff]
        %v301 = vmul.f32 %v272, %v272
        %v302 = vsel %vm273, %v301, 0.0
        %303 = vadd.xlane.f32.xlu0 %v302
        %v304 = vpop.xlane.xlu0 %303
        %v305 = vrot.slane %v304, 4
        %v306 = vadd.f32 %v304, %v305
        %v307 = vrot.slane %v306, 2
        %v308 = vadd.f32 %v306, %v307
        %v309 = vrot.slane %v308, 1
        %v310 = vadd.f32 %v308, %v309
        %v311 = vadd.f32 %v300, %v310
        %312 = vst [vmem:[%s254] sm:$0xff] %v311
        %s313 = sand.u32 %s103, 1
        %s314 = scalar_lea.sflag [#allocation4], %s313
        %s315 = sand.u32 %s103, 1
        %s316 = smul.addr %s315, 8
        %s317 = scalar_lea.vmem [#allocation7], %s316
        %s318 = sand.u32 %s129, 1
        %s319 = scalar_lea.sflag [#allocation9], %s318
        %s320 = sand.u32 %s129, 1
        %s321 = smul.addr %s320, 8
        %s322 = scalar_lea.vmem [#allocation8], %s321
        // Predicated region
        $region41: #{tpu_custom_call.1} parent=27 // pred_check
          %p323 = pneg %p113
        $region42: #{tpu_custom_call.1} parent=27 // pred_check_branch
          %325 = sbr.rel (%p323) target = $region44
        $region43: #{tpu_custom_call.1} parent=27 // pred_region
          %s327 = ssub.s32 128, 128
          %328 = vsyncadd %s314, %s327
          %s329 = smul.addr %s31, 128
          %s330 = scalar_lea.hbm %s2, %s329
          %s332 = sshll.u32 %s317, 4
          %s333 = int_to_ptr.vmem [resolvable:$true] %s332
          %335 = dma.vmem_to_hbm [thread:$0]  %s333, 128, %s330, %s314
        $region44: #{tpu_custom_call.1} parent=27 // pred_fallthru
          _
        // Predicated region
        $region45: #{tpu_custom_call.1} parent=27 // pred_check
          %p336 = pneg %p139
        $region46: #{tpu_custom_call.1} parent=27 // pred_check_branch
          %338 = sbr.rel (%p336) target = $region48
        $region47: #{tpu_custom_call.1} parent=27 // pred_region
          %s340 = ssub.s32 128, 128
          %341 = vsyncadd %s319, %s340
          %s342 = smul.addr %s31, 128
          %s343 = scalar_lea.hbm %s3, %s342
          %s345 = sshll.u32 %s322, 4
          %s346 = int_to_ptr.vmem [resolvable:$true] %s345
          %348 = dma.vmem_to_hbm [thread:$0]  %s346, 128, %s343, %s319
        $region48: #{tpu_custom_call.1} parent=27 // pred_fallthru
          _
      $region28: #{tpu_custom_call.1} parent=5 // pred_fallthru
        _
      %p349 = scmp.le.s32.totalorder 2, %s22
      // Predicated region
      $region49: #{tpu_custom_call.1} parent=5 // pred_check
        %p350 = pneg %p349
      $region50: #{tpu_custom_call.1} parent=5 // pred_check_branch
        %352 = sbr.rel (%p350) target = $region52
      $region51: #{tpu_custom_call.1} parent=5 // pred_region
        %s353 = ssub.s32 %s22, 2
        // Predicated region
        $region53: #{tpu_custom_call.1} parent=51 // pred_check
          %p354 = pneg %p119
        $region54: #{tpu_custom_call.1} parent=51 // pred_check_branch
          %356 = sbr.rel (%p354) target = $region56
        $region55: #{tpu_custom_call.1} parent=51 // pred_region
          %s357 = sand.u32 %s104, 1
          %s358 = scalar_lea.sflag [#allocation4], %s357
          %s359 = sand.u32 %s104, 1
          %s360 = smul.addr %s359, 8
          %s361 = scalar_lea.vmem [#allocation7], %s360
          %362 = dma.done %s358, 128
        $region56: #{tpu_custom_call.1} parent=51 // pred_fallthru
          _
        // Predicated region
        $region57: #{tpu_custom_call.1} parent=51 // pred_check
          %p363 = pneg %p145
        $region58: #{tpu_custom_call.1} parent=51 // pred_check_branch
          %365 = sbr.rel (%p363) target = $region60
        $region59: #{tpu_custom_call.1} parent=51 // pred_region
          %s366 = sand.u32 %s130, 1
          %s367 = scalar_lea.sflag [#allocation9], %s366
          %s368 = sand.u32 %s130, 1
          %s369 = smul.addr %s368, 8
          %s370 = scalar_lea.vmem [#allocation8], %s369
          %371 = dma.done %s367, 128
        $region60: #{tpu_custom_call.1} parent=51 // pred_fallthru
          _
      $region52: #{tpu_custom_call.1} parent=5 // pred_fallthru
        _
    $region6: #{tpu_custom_call.1} parent=1 // loop_footer
      %s26 = sadd.s32 1, %s22
    $region7: #{tpu_custom_call.1} parent=1 // loop_footer_branch
      %21 = sbr.rel target = $region3
    $region8: #{tpu_custom_call.1} parent=1 // loop_exit
      _
    %372 = vsyncpa [#allocation3], 1
    %s373 = scalar_lea.sflag [#allocation3], 1
    %374 = vsyncpa %s373, 1
    %375 = vsyncpa [#allocation6], 1
    %s376 = scalar_lea.sflag [#allocation6], 1
    %377 = vsyncpa %s376, 1
    %378 = vsyncpa [#allocation4], 1
    %s379 = scalar_lea.sflag [#allocation4], 1
    %380 = vsyncpa %s379, 1
    %381 = vsyncpa [#allocation9], 1
    %s382 = scalar_lea.sflag [#allocation9], 1
    %383 = vsyncpa %s382, 1

</llo_original>
